<compile_context>
chip_gen: v7x
topology: tpu7x:2x2x1
jax: 0.10.0
libtpu: 0.0.40
codegen_flags: <defaults>
</compile_context>

<pallas_src>
import functools

import jax
import jax.numpy as jnp
from jax.experimental import pallas as pl
from jax.experimental.pallas import tpu as pltpu


def _round_up(n, m):
    return ((n + m - 1) // m) * m


def _adv_kernel(x_ref, w_ref, b_ref, o_ref, acc_ref, *, f_total, f_tile, need_mask):
    # x_ref:   [TB, TF]  batch rows on sublanes, features on lanes (contiguous DMA)
    # w_ref:   [1, TF]   lane-dense weight row, broadcast along sublanes
    # b_ref:   [1]       scalar bias in SMEM
    # o_ref:   [TB, 1]   output column (resident across the reduction axis)
    # acc_ref: [TB, 1]   f32 accumulator scratch
    k = pl.program_id(1)

    @pl.when(k == 0)
    def _init():
        acc_ref[...] = jnp.zeros_like(acc_ref)

    x = x_ref[...].astype(jnp.float32)            # upcast in-kernel (free VPU filler)
    w = w_ref[...].astype(jnp.float32)            # [1, TF] sublane broadcast
    prod = x * w                                  # VPU
    if need_mask:                                 # ragged last F-block: zero padded lanes
        col = jax.lax.broadcasted_iota(jnp.int32, prod.shape, 1) + k * f_tile
        prod = jnp.where(col < f_total, prod, 0.0)
    acc_ref[...] += jnp.sum(prod, axis=-1, keepdims=True)   # XLU lane reduce -> [TB, 1]

    @pl.when(k == pl.num_programs(1) - 1)
    def _finalize():
        y = acc_ref[...] + b_ref[0]               # scalar bias from SMEM
        o_ref[...] = jax.nn.sigmoid(y).astype(o_ref.dtype)   # EUP sigmoid


def little_adversarial_forward(x, weight, bias, *, vmem_budget_bytes=10 * 1024 * 1024):
    """x: [B, F], weight: [1, F] (PyTorch Linear layout), bias: [1] -> [B, 1]."""
    B, F = x.shape
    itemsize = jnp.dtype(x.dtype).itemsize
    out_dtype = x.dtype
    out_itemsize = jnp.dtype(out_dtype).itemsize

    # --- Feature (lane / reduction) tile: whole F unless F is enormous. ---
    TF = F
    if F > 128:
        # Keep an 8-row x tile at <= ~2 MiB; only very large F ever splits.
        max_tf = max(128, ((2 * 1024 * 1024) // (8 * itemsize)) // 128 * 128)
        if F > max_tf:
            TF = max_tf
    G_f = pl.cdiv(F, TF)
    need_mask = (G_f * TF) != F

    # --- Batch (sublane) tile: sized from a VMEM budget. ---
    # Per row: double-buffered x tile + double-buffered lane-padded output
    # column + lane-padded f32 accumulator column.
    per_row_bytes = 2 * TF * itemsize + 2 * 128 * out_itemsize + 128 * 4
    rows = max(8, (vmem_budget_bytes // per_row_bytes) // 8 * 8)
    # v7x: when the input is big enough to be worth splitting, guarantee
    # G_b >= 2 so the "parallel" axis feeds both TensorCores.
    if B * F * itemsize >= (1 << 20):
        rows = min(rows, _round_up((B + 1) // 2, 8))
    TB = max(8, min(rows, _round_up(B, 8)))
    G_b = pl.cdiv(B, TB)

    w_row = weight.reshape(1, F)                     # native dtype, no wrapper cast
    b = bias.reshape(1).astype(jnp.float32)          # scalar -> SMEM

    kernel = functools.partial(
        _adv_kernel, f_total=F, f_tile=TF, need_mask=need_mask
    )

    out = pl.pallas_call(
        kernel,
        out_shape=jax.ShapeDtypeStruct((B, 1), out_dtype),
        grid=(G_b, G_f),
        in_specs=[
            pl.BlockSpec((TB, TF), lambda i, k: (i, k)),            # x, contiguous rows
            pl.BlockSpec((1, TF), lambda i, k: (0, k)),             # weight row
            pl.BlockSpec(memory_space=pltpu.MemorySpace.SMEM),      # bias scalar
        ],
        out_specs=pl.BlockSpec((TB, 1), lambda i, k: (i, 0)),       # resident over k
        scratch_shapes=[pltpu.VMEM((TB, 1), jnp.float32)],          # f32 accumulator
        compiler_params=pltpu.CompilerParams(
            dimension_semantics=("parallel", "arbitrary"),          # batch // , F reduce
        ),
    )(x, w_row, b)

    return out


if __name__ == "__main__":
    batch = 8
    in_feature = 32

    key = jax.random.PRNGKey(0)
    kx, kw = jax.random.split(key)

    # Deterministic parameter init matching the PyTorch module's __init__:
    #   weight ~ Normal(0, 0.01), shape [1, in_feature]; bias = 0, shape [1].
    weight = 0.01 * jax.random.normal(kw, (1, in_feature), dtype=jnp.float32)
    bias = jnp.zeros((1,), dtype=jnp.float32)

    x = jax.random.normal(kx, (batch, in_feature), dtype=jnp.float32)

    out = little_adversarial_forward(x, weight, bias)
    out = jax.block_until_ready(out)

    # Reference check against plain JAX.
    ref = jax.nn.sigmoid(x @ weight.T + bias)
    assert out.shape == (batch, 1)
    assert jnp.allclose(out, ref, atol=1e-5, rtol=1e-5)

    print("KERNEL_OK")
</pallas_src>

<mosaic_0001>
module attributes {stable_mosaic.version = 11 : i64} {
  func.func @_adv_kernel(%arg0: i32, %arg1: i32, %arg2: memref<8x32xf32, #tpu.memory_space<vmem>>, %arg3: memref<1x32xf32, #tpu.memory_space<vmem>>, %arg4: memref<1xf32, #tpu.memory_space<smem>>, %arg5: memref<8x1xf32, #tpu.memory_space<vmem>>, %arg6: memref<8x1xf32, #tpu.memory_space<vmem>>) attributes {dimension_semantics = [#tpu.dimension_semantics<parallel>, #tpu.dimension_semantics<arbitrary>], iteration_bounds = array<i64: 1, 1>, scalar_prefetch = 0 : i64, scratch_operands = 1 : i64, tpu.core_type = #tpu.core_type<tc>, window_params = [{transform_indices = @transform_0, window_bounds = array<i64: 8, 32>}, {transform_indices = @transform_1, window_bounds = array<i64: 1, 32>}, {transform_indices = @transform_2, window_bounds = array<i64: 1>}, {transform_indices = @transform_3, window_bounds = array<i64: 8, 1>}]} {
    %c0_i32 = arith.constant 0 : i32
    %0 = arith.cmpi eq, %arg1, %c0_i32 : i32
    %1 = arith.extui %0 : i1 to i32
    %c0_i32_0 = arith.constant 0 : i32
    %2 = arith.cmpi ne, %1, %c0_i32_0 : i32
    scf.if %2 {
      %cst_10 = arith.constant 0.000000e+00 : f32
      %15 = vector.broadcast %cst_10 : f32 to vector<8x1xf32>
      %c0_11 = arith.constant 0 : index
      %c0_12 = arith.constant 0 : index
      %16 = vector.load %arg6[%c0_11, %c0_12] : memref<8x1xf32, #tpu.memory_space<vmem>>, vector<8x1xf32>
      tpu.vector_store %arg6[%c0_11, %c0_12], %15 {strides = array<i32>} : memref<8x1xf32, #tpu.memory_space<vmem>>, vector<8x1xf32>,
    } else {
    }
    %c0 = arith.constant 0 : index
    %c0_1 = arith.constant 0 : index
    %3 = vector.load %arg2[%c0, %c0_1] : memref<8x32xf32, #tpu.memory_space<vmem>>, vector<8x32xf32>
    %c0_2 = arith.constant 0 : index
    %c0_3 = arith.constant 0 : index
    %4 = vector.load %arg3[%c0_2, %c0_3] : memref<1x32xf32, #tpu.memory_space<vmem>>, vector<1x32xf32>
    %5 = vector.broadcast %4 : vector<1x32xf32> to vector<8x32xf32>
    %6 = arith.mulf %3, %5 : vector<8x32xf32>
    %c0_4 = arith.constant 0 : index
    %c0_5 = arith.constant 0 : index
    %7 = vector.load %arg6[%c0_4, %c0_5] : memref<8x1xf32, #tpu.memory_space<vmem>>, vector<8x1xf32>
    %cst = arith.constant dense<0.000000e+00> : vector<8xf32>
    %8 = vector.multi_reduction <add>, %6, %cst [1] : vector<8x32xf32> to vector<8xf32>
    %9 = vector.shape_cast %8 : vector<8xf32> to vector<8x1xf32>
    %10 = arith.addf %7, %9 : vector<8x1xf32>
    %c0_6 = arith.constant 0 : index
    %c0_7 = arith.constant 0 : index
    %11 = vector.load %arg6[%c0_6, %c0_7] : memref<8x1xf32, #tpu.memory_space<vmem>>, vector<8x1xf32>
    tpu.vector_store %arg6[%c0_6, %c0_7], %10 {strides = array<i32>} : memref<8x1xf32, #tpu.memory_space<vmem>>, vector<8x1xf32>,
    %c0_i32_8 = arith.constant 0 : i32
    %12 = arith.cmpi eq, %arg1, %c0_i32_8 : i32
    %13 = arith.extui %12 : i1 to i32
    %c0_i32_9 = arith.constant 0 : i32
    %14 = arith.cmpi ne, %13, %c0_i32_9 : i32
    scf.if %14 {
      %c0_10 = arith.constant 0 : index
      %c0_11 = arith.constant 0 : index
      %15 = vector.load %arg6[%c0_10, %c0_11] : memref<8x1xf32, #tpu.memory_space<vmem>>, vector<8x1xf32>
      %c0_12 = arith.constant 0 : index
      %16 = memref.load %arg4[%c0_12] : memref<1xf32, #tpu.memory_space<smem>>
      %17 = vector.broadcast %16 : f32 to vector<8x1xf32>
      %18 = arith.addf %15, %17 : vector<8x1xf32>
      %19 = arith.negf %18 : vector<8x1xf32>
      %20 = math.exp %19 : vector<8x1xf32>
      %cst_13 = arith.constant 1.000000e+00 : f32
      %21 = vector.broadcast %cst_13 : f32 to vector<8x1xf32>
      %22 = arith.addf %21, %20 : vector<8x1xf32>
      %23 = arith.divf %21, %22 : vector<8x1xf32>
      %c0_14 = arith.constant 0 : index
      %c0_15 = arith.constant 0 : index
      %24 = vector.load %arg5[%c0_14, %c0_15] : memref<8x1xf32, #tpu.memory_space<vmem>>, vector<8x1xf32>
      tpu.vector_store %arg5[%c0_14, %c0_15], %23 {strides = array<i32>} : memref<8x1xf32, #tpu.memory_space<vmem>>, vector<8x1xf32>,
    } else {
    }
    return
  }
  func.func @transform_0(%arg0: i32, %arg1: i32) -> (i32, i32) {
    %c0_i32 = arith.constant 0 : i32
    return %arg0, %arg1 : i32, i32
  }
  func.func @transform_1(%arg0: i32, %arg1: i32) -> (i32, i32) {
    %c0_i32 = arith.constant 0 : i32
    %c0_i32_0 = arith.constant 0 : i32
    return %c0_i32, %arg1 : i32, i32
  }
  func.func @transform_2(%arg0: i32, %arg1: i32) -> i32 {
    %c0_i32 = arith.constant 0 : i32
    %c0_i32_0 = arith.constant 0 : i32
    return %c0_i32 : i32
  }
  func.func @transform_3(%arg0: i32, %arg1: i32) -> (i32, i32) {
    %c0_i32 = arith.constant 0 : i32
    %c0_i32_0 = arith.constant 0 : i32
    return %arg0, %c0_i32 : i32, i32
  }
}

</mosaic_0001>

<llo_original>
// kernel: tpu_custom_call.1
$region0: #{tpu_custom_call.1}
  #allocation0 [shape = 'u32[]', space=smem, size = 0x4, offset = 0x4, fixed_abs, tag = 'smem constant byte address 0x4 - core index']
  #allocation1 [shape = 'u32[144,128]{1,0:T(1,128)}', space=vmem, size = 0x12000, scoped, tag = 'internal scratch']
  #allocation2 [shape = 'f32[8,1]{1,0:T(8,128)}', space=vmem, size = 0x1000, scoped, tag = 'scratch operand']
  #allocation3 [shape = 'f32[1]{0:T(128)S(6)}', space=smem, size = 0x200, scoped, tag = 'scoped memory for tpu_custom_call.1']
  %s0 = inlined_call_operand.hbm [shape: f32[8,32], index: 0, kind: input, shape index: {}]
  %s1 = inlined_call_operand.vmem [shape: f32[1,32], index: 1, kind: input, shape index: {}]
  %s2 = inlined_call_operand.<no memory space> [shape: f32[1], index: 2, kind: input, shape index: {}]
  %s3 = inlined_call_operand.vmem [shape: f32[8,1], index: 3, kind: output, shape index: {}]
  %s4 = sld [smem:[#allocation0]]
  $region34: #{tpu_custom_call.1} parent=0
    _
  %s6 = ssub.s32 1, %s4
  %s7 = scalar_select 0, %s6, %s4
  %8 = sst [smem:[#allocation3]] %s2
  $region1: #{tpu_custom_call.1} parent=0
    #allocation4 [shape = 'u8[4096]{0}', space=vmem, size = 0x1000, scoped, tag = 'input window, operand 0, single buffered']
    #allocation5 [shape = 's32[1]{0}', space=sflag, size = 0x4, scoped, tag = 'scoped memory for tpu_custom_call.1']
    %9 = vsyncpa [#allocation5], 0
    // Predicated region
    $region2: #{tpu_custom_call.1} parent=1 // pred_check
      _
    $region3: #{tpu_custom_call.1} parent=1 // pred_check_branch
      %11 = sbr.rel (0) target = $region5
    $region4: #{tpu_custom_call.1} parent=1 // pred_region
      %s13 = ssub.s32 128, 128
      %14 = vsyncadd [#allocation5], %s13
      %s16 = sshll.u32 [#allocation4], 4
      %s17 = int_to_ptr.vmem [resolvable:$true] %s16
      %19 = dma.hbm_to_vmem [thread:$0]  %s0, 128, %s17, [#allocation5]
    $region5: #{tpu_custom_call.1} parent=1 // pred_fallthru
      _
    // Predicated region
    $region6: #{tpu_custom_call.1} parent=1 // pred_check
      _
    $region7: #{tpu_custom_call.1} parent=1 // pred_check_branch
      %21 = sbr.rel (0) target = $region9
    $region8: #{tpu_custom_call.1} parent=1 // pred_region
      _
    $region9: #{tpu_custom_call.1} parent=1 // pred_fallthru
      _
    // Predicated region
    $region10: #{tpu_custom_call.1} parent=1 // pred_check
      _
    $region11: #{tpu_custom_call.1} parent=1 // pred_check_branch
      %23 = sbr.rel (0) target = $region13
    $region12: #{tpu_custom_call.1} parent=1 // pred_region
      _
    $region13: #{tpu_custom_call.1} parent=1 // pred_fallthru
      _
    // Predicated region
    $region14: #{tpu_custom_call.1} parent=1 // pred_check
      _
    $region15: #{tpu_custom_call.1} parent=1 // pred_check_branch
      %25 = sbr.rel (0) target = $region17
    $region16: #{tpu_custom_call.1} parent=1 // pred_region
      %26 = dma.done [#allocation5], 128
    $region17: #{tpu_custom_call.1} parent=1 // pred_fallthru
      _
    %p27 = scmp.eq.s32.totalorder 0, 0
    // Predicated region
    $region18: #{tpu_custom_call.1} parent=1 // pred_check
      %p28 = pneg %p27
    $region19: #{tpu_custom_call.1} parent=1 // pred_check_branch
      %30 = sbr.rel (%p28) target = $region21
    $region20: #{tpu_custom_call.1} parent=1 // pred_region
      %vm31 = vcmask 7168
      %32 = vst.msk [vmem:[#allocation2] sm:$0xff] %vm31, 0.0
    $region21: #{tpu_custom_call.1} parent=1 // pred_fallthru
      _
    %v33 = vld [vmem:[#allocation4] sm:$0xff]
    %v34 = vld [vmem:[%s1] sm:$0x1]
    %v36 = vlaneseq
    %v37 = vshrl.u32 %v36, 7
    %v38 = vsub.s32 0, %v37
    %v39 = vrot.slane %v34, %v38
    %v41 = vmul.f32 %v33, %v39
    %v42 = vld [vmem:[#allocation2] sm:$0xff]
    %vm43 = vcmask 261120
    %v44 = vsel %vm43, %v41, 0.0
    %45 = vadd.xlane.f32.xlu0 %v44
    %v46 = vpop.xlane.xlu0 %45
    %v47 = vadd.f32 %v42, %v46
    %vm48 = vcmask 7168
    %49 = vst.msk [vmem:[#allocation2] sm:$0xff] %vm48, %v47
    // Predicated region
    $region22: #{tpu_custom_call.1} parent=1 // pred_check
      %p50 = pneg %p27
    $region23: #{tpu_custom_call.1} parent=1 // pred_check_branch
      %52 = sbr.rel (%p50) target = $region25
    $region24: #{tpu_custom_call.1} parent=1 // pred_region
      %v53 = vld [vmem:[#allocation2] sm:$0xff]
      %s54 = sld [smem:[#allocation3]]
      %v55 = vstv %s54
      %v56 = vadd.f32 %v53, %v55
      %v57 = vxor.u32 %v56, 2147483648
      %v58 = vmul.f32 %v57, 1.442695
      %v59 = vpow.pop %v58
      %v60 = vadd.f32 %v59, 1.0
      %v61 = vrcp.pop %v60
      %v62 = vmul.f32 1.0, %v61
      %63 = vst.msk [vmem:[%s3] sm:$0xff] %vm48, %v62
    $region25: #{tpu_custom_call.1} parent=1 // pred_fallthru
      _
    // Predicated region
    $region26: #{tpu_custom_call.1} parent=1 // pred_check
      _
    $region27: #{tpu_custom_call.1} parent=1 // pred_check_branch
      %65 = sbr.rel (0) target = $region29
    $region28: #{tpu_custom_call.1} parent=1 // pred_region
      _
    $region29: #{tpu_custom_call.1} parent=1 // pred_fallthru
      _
    // Predicated region
    $region30: #{tpu_custom_call.1} parent=1 // pred_check
      _
    $region31: #{tpu_custom_call.1} parent=1 // pred_check_branch
      %67 = sbr.rel (0) target = $region33
    $region32: #{tpu_custom_call.1} parent=1 // pred_region
      _
    $region33: #{tpu_custom_call.1} parent=1 // pred_fallthru
      _
    %68 = vsyncpa [#allocation5], 1

</llo_original>
